<compile_context>
chip_gen: v7x
topology: tpu7x:2x2x1
jax: 0.10.0
libtpu: 0.0.40
codegen_flags: <defaults>
</compile_context>

<pallas_src>
import jax
import jax.numpy as jnp
from jax.experimental import pallas as pl
from jax.experimental.pallas import tpu as pltpu

IN_FEATURES = 784
NUM_CLASSES = 10
OUT_PAD = 128         # lane-dense logits block (do NOT narrow below 128)
NEG_INF = -1e30       # bias for padded logit columns (masks them out of lse)


def _mlp_kernel(x_ref, w1_ref, b1_ref, w2_ref, b2_ref, w3_ref, b3_ref,
                w4_ref, b4_ref, o_ref):
    # fc1 + relu (x tile cast f32->bf16 in-kernel; bf16 MXU, f32 accumulation)
    x = x_ref[...].astype(jnp.bfloat16)
    h = jnp.dot(x, w1_ref[...], preferred_element_type=jnp.float32)
    h = jnp.maximum(h + b1_ref[...], 0.0)
    # fc2 + relu
    h = jnp.dot(h.astype(jnp.bfloat16), w2_ref[...],
                preferred_element_type=jnp.float32)
    h = jnp.maximum(h + b2_ref[...], 0.0)
    # fc3 + relu
    h = jnp.dot(h.astype(jnp.bfloat16), w3_ref[...],
                preferred_element_type=jnp.float32)
    h = jnp.maximum(h + b3_ref[...], 0.0)
    # fc4 (output padded to 128 lanes; padded columns carry bias = -1e30, f32)
    logits = jnp.dot(h.astype(jnp.bfloat16), w4_ref[...],
                     preferred_element_type=jnp.float32)
    logits = logits + b4_ref[...]
    # log_softmax over classes (f32); padded cols contribute exp(-1e30 - m) == 0
    m = jnp.max(logits, axis=-1, keepdims=True)
    z = logits - m
    lse = jnp.log(jnp.sum(jnp.exp(z), axis=-1, keepdims=True))
    o_ref[...] = (z - lse).astype(o_ref.dtype)


def _prepare_kernel_params(params):
    """Cast PyTorch-layout params ((in,out) weights, (1,out) biases) for the kernel."""
    (w1, b1), (w2, b2), (w3, b3), (w4, b4) = params
    # fc4: pad N 10 -> 128; zero weight columns + -1e30 bias keeps the padded
    # logits out of the log_softmax normalizer.
    w4p = jnp.zeros((w4.shape[0], OUT_PAD), jnp.float32).at[:, :NUM_CLASSES].set(w4)
    b4p = jnp.full((1, OUT_PAD), NEG_INF, jnp.float32).at[:, :NUM_CLASSES].set(
        b4.reshape(1, -1))
    bf16 = lambda w: w.astype(jnp.bfloat16)
    f32 = lambda b: b.reshape(1, -1).astype(jnp.float32)
    return [(bf16(w1), f32(b1)), (bf16(w2), f32(b2)),
            (bf16(w3), f32(b3)), (bf16(w4p), f32(b4p))]


def _round_up(v, m):
    return ((v + m - 1) // m) * m


def classifier_forward(x, params, *, tile_b=1024):
    """x: (B, C, H, W) with C*H*W == 784, like x.view(B, -1) in the module.

    Returns (B, 10) bfloat16 log-probabilities.
    """
    B = x.shape[0]
    x2d = x.reshape(B, -1)   # contiguous reshape; dtype left as-is (cast in-kernel)

    (w1, b1), (w2, b2), (w3, b3), (w4, b4) = _prepare_kernel_params(params)

    # Tile selection: large tiles for DMA/MXU efficiency; for small/medium B
    # shrink so the grid has >= 2 steps (both v7x TCs busy), rounded to 16.
    if B <= 2 * tile_b:
        tile_b = max(16, _round_up(pl.cdiv(B, 2), 16))
    grid = (pl.cdiv(B, tile_b),)   # ragged last tile masked on writeback

    def resident(a):
        # Full-array block, same block for every grid step -> stays in VMEM.
        return pl.BlockSpec(a.shape, lambda i: (0,) * a.ndim)

    in_specs = [
        pl.BlockSpec((tile_b, IN_FEATURES), lambda i: (i, 0)),   # x tile (pipelined)
        resident(w1), resident(b1),
        resident(w2), resident(b2),
        resident(w3), resident(b3),
        resident(w4), resident(b4),
    ]
    out_spec = pl.BlockSpec((tile_b, OUT_PAD), lambda i: (i, 0))

    out = pl.pallas_call(
        _mlp_kernel,
        out_shape=jax.ShapeDtypeStruct((B, OUT_PAD), jnp.bfloat16),
        grid=grid,
        in_specs=in_specs,
        out_specs=out_spec,
        compiler_params=pltpu.CompilerParams(
            dimension_semantics=("parallel",),
            vmem_limit_bytes=32 * 1024 * 1024,
        ),
    )(x2d, w1, b1, w2, b2, w3, b3, w4, b4)

    return out[:, :NUM_CLASSES]


def init_params(key):
    """Deterministic init matching nn.Linear shapes (stored as (in, out))."""
    dims = [(784, 256), (256, 128), (128, 64), (64, 10)]
    params = []
    for i, (fan_in, fan_out) in enumerate(dims):
        kw, kb = jax.random.split(jax.random.fold_in(key, i))
        bound = 1.0 / jnp.sqrt(fan_in)
        w = jax.random.uniform(kw, (fan_in, fan_out), jnp.float32, -bound, bound)
        b = jax.random.uniform(kb, (1, fan_out), jnp.float32, -bound, bound)
        params.append((w, b))
    return params


def _reference_forward(x, params):
    """Pure-JAX f32 reference (eval-mode dropout = identity)."""
    h = x.reshape(x.shape[0], -1).astype(jnp.float32)
    (w1, b1), (w2, b2), (w3, b3), (w4, b4) = params
    h = jnp.maximum(h @ w1 + b1, 0.0)
    h = jnp.maximum(h @ w2 + b2, 0.0)
    h = jnp.maximum(h @ w3 + b3, 0.0)
    logits = h @ w4 + b4
    return jax.nn.log_softmax(logits, axis=-1)


if __name__ == "__main__":
    key = jax.random.PRNGKey(0)
    kx, kp = jax.random.split(key)
    # Small batch of MNIST-like images, NCHW.
    x = jax.random.normal(kx, (2, 1, 28, 28), dtype=jnp.float32)
    params = init_params(kp)

    out = classifier_forward(x, params)
    out = jax.block_until_ready(out)

    # Sanity: shape, normalized log-probs, and agreement with f32 reference
    # (tolerances account for bf16 MXU operands and bf16 output store).
    out_f32 = out.astype(jnp.float32)
    ref = _reference_forward(x, params)
    probs_sum = jnp.sum(jnp.exp(out_f32), axis=1)
    assert out.shape == (2, 10)
    assert bool(jnp.all(jnp.abs(probs_sum - 1.0) < 2e-2))
    assert bool(jnp.max(jnp.abs(out_f32 - ref)) < 0.1)
    print("KERNEL_OK")
</pallas_src>

<mosaic_0001>
module attributes {stable_mosaic.version = 11 : i64} {
  func.func @_mlp_kernel(%arg0: i32, %arg1: memref<16x784xf32, #tpu.memory_space<vmem>>, %arg2: memref<784x256xbf16, #tpu.memory_space<vmem>>, %arg3: memref<1x256xf32, #tpu.memory_space<vmem>>, %arg4: memref<256x128xbf16, #tpu.memory_space<vmem>>, %arg5: memref<1x128xf32, #tpu.memory_space<vmem>>, %arg6: memref<128x64xbf16, #tpu.memory_space<vmem>>, %arg7: memref<1x64xf32, #tpu.memory_space<vmem>>, %arg8: memref<64x128xbf16, #tpu.memory_space<vmem>>, %arg9: memref<1x128xf32, #tpu.memory_space<vmem>>, %arg10: memref<16x128xbf16, #tpu.memory_space<vmem>>) attributes {dimension_semantics = [#tpu.dimension_semantics<parallel>], iteration_bounds = array<i64: 1>, scalar_prefetch = 0 : i64, scratch_operands = 0 : i64, tpu.core_type = #tpu.core_type<tc>, window_params = [{transform_indices = @transform_0, window_bounds = array<i64: 16, 784>}, {pipeline_mode = #tpu.pipeline_mode<synchronous>, transform_indices = @transform_1, window_bounds = array<i64: 784, 256>}, {pipeline_mode = #tpu.pipeline_mode<synchronous>, transform_indices = @transform_2, window_bounds = array<i64: 1, 256>}, {pipeline_mode = #tpu.pipeline_mode<synchronous>, transform_indices = @transform_3, window_bounds = array<i64: 256, 128>}, {pipeline_mode = #tpu.pipeline_mode<synchronous>, transform_indices = @transform_4, window_bounds = array<i64: 1, 128>}, {pipeline_mode = #tpu.pipeline_mode<synchronous>, transform_indices = @transform_5, window_bounds = array<i64: 128, 64>}, {pipeline_mode = #tpu.pipeline_mode<synchronous>, transform_indices = @transform_6, window_bounds = array<i64: 1, 64>}, {pipeline_mode = #tpu.pipeline_mode<synchronous>, transform_indices = @transform_7, window_bounds = array<i64: 64, 128>}, {pipeline_mode = #tpu.pipeline_mode<synchronous>, transform_indices = @transform_8, window_bounds = array<i64: 1, 128>}, {transform_indices = @transform_9, window_bounds = array<i64: 16, 128>}]} {
    %c0 = arith.constant 0 : index
    %c0_0 = arith.constant 0 : index
    %0 = vector.load %arg1[%c0, %c0_0] : memref<16x784xf32, #tpu.memory_space<vmem>>, vector<16x784xf32>
    %1 = arith.truncf %0 : vector<16x784xf32> to vector<16x784xbf16>
    %c0_1 = arith.constant 0 : index
    %c0_2 = arith.constant 0 : index
    %2 = vector.load %arg2[%c0_1, %c0_2] : memref<784x256xbf16, #tpu.memory_space<vmem>>, vector<784x256xbf16>
    %cst = arith.constant dense<0.000000e+00> : vector<16x256xf32>
    %3 = tpu.matmul %1, %2, %cst {dimension_numbers = #tpu.dot_dimension_numbers<[1], [0], [0], [1], [0, 0, 1, 1], [], []>} : vector<16x784xbf16>, vector<784x256xbf16>, vector<16x256xf32> -> vector<16x256xf32>
    %c0_3 = arith.constant 0 : index
    %c0_4 = arith.constant 0 : index
    %4 = vector.load %arg3[%c0_3, %c0_4] : memref<1x256xf32, #tpu.memory_space<vmem>>, vector<1x256xf32>
    %5 = vector.broadcast %4 : vector<1x256xf32> to vector<16x256xf32>
    %6 = arith.addf %3, %5 : vector<16x256xf32>
    %cst_5 = arith.constant 0.000000e+00 : f32
    %7 = vector.broadcast %cst_5 : f32 to vector<16x256xf32>
    %8 = arith.maximumf %6, %7 : vector<16x256xf32>
    %9 = arith.truncf %8 : vector<16x256xf32> to vector<16x256xbf16>
    %c0_6 = arith.constant 0 : index
    %c0_7 = arith.constant 0 : index
    %10 = vector.load %arg4[%c0_6, %c0_7] : memref<256x128xbf16, #tpu.memory_space<vmem>>, vector<256x128xbf16>
    %cst_8 = arith.constant dense<0.000000e+00> : vector<16x128xf32>
    %11 = tpu.matmul %9, %10, %cst_8 {dimension_numbers = #tpu.dot_dimension_numbers<[1], [0], [0], [1], [0, 0, 1, 1], [], []>} : vector<16x256xbf16>, vector<256x128xbf16>, vector<16x128xf32> -> vector<16x128xf32>
    %c0_9 = arith.constant 0 : index
    %c0_10 = arith.constant 0 : index
    %12 = vector.load %arg5[%c0_9, %c0_10] : memref<1x128xf32, #tpu.memory_space<vmem>>, vector<1x128xf32>
    %13 = vector.broadcast %12 : vector<1x128xf32> to vector<16x128xf32>
    %14 = arith.addf %11, %13 : vector<16x128xf32>
    %cst_11 = arith.constant 0.000000e+00 : f32
    %15 = vector.broadcast %cst_11 : f32 to vector<16x128xf32>
    %16 = arith.maximumf %14, %15 : vector<16x128xf32>
    %17 = arith.truncf %16 : vector<16x128xf32> to vector<16x128xbf16>
    %c0_12 = arith.constant 0 : index
    %c0_13 = arith.constant 0 : index
    %18 = vector.load %arg6[%c0_12, %c0_13] : memref<128x64xbf16, #tpu.memory_space<vmem>>, vector<128x64xbf16>
    %cst_14 = arith.constant dense<0.000000e+00> : vector<16x64xf32>
    %19 = tpu.matmul %17, %18, %cst_14 {dimension_numbers = #tpu.dot_dimension_numbers<[1], [0], [0], [1], [0, 0, 1, 1], [], []>} : vector<16x128xbf16>, vector<128x64xbf16>, vector<16x64xf32> -> vector<16x64xf32>
    %c0_15 = arith.constant 0 : index
    %c0_16 = arith.constant 0 : index
    %20 = vector.load %arg7[%c0_15, %c0_16] : memref<1x64xf32, #tpu.memory_space<vmem>>, vector<1x64xf32>
    %21 = vector.broadcast %20 : vector<1x64xf32> to vector<16x64xf32>
    %22 = arith.addf %19, %21 : vector<16x64xf32>
    %cst_17 = arith.constant 0.000000e+00 : f32
    %23 = vector.broadcast %cst_17 : f32 to vector<16x64xf32>
    %24 = arith.maximumf %22, %23 : vector<16x64xf32>
    %25 = arith.truncf %24 : vector<16x64xf32> to vector<16x64xbf16>
    %c0_18 = arith.constant 0 : index
    %c0_19 = arith.constant 0 : index
    %26 = vector.load %arg8[%c0_18, %c0_19] : memref<64x128xbf16, #tpu.memory_space<vmem>>, vector<64x128xbf16>
    %cst_20 = arith.constant dense<0.000000e+00> : vector<16x128xf32>
    %27 = tpu.matmul %25, %26, %cst_20 {dimension_numbers = #tpu.dot_dimension_numbers<[1], [0], [0], [1], [0, 0, 1, 1], [], []>} : vector<16x64xbf16>, vector<64x128xbf16>, vector<16x128xf32> -> vector<16x128xf32>
    %c0_21 = arith.constant 0 : index
    %c0_22 = arith.constant 0 : index
    %28 = vector.load %arg9[%c0_21, %c0_22] : memref<1x128xf32, #tpu.memory_space<vmem>>, vector<1x128xf32>
    %29 = vector.broadcast %28 : vector<1x128xf32> to vector<16x128xf32>
    %30 = arith.addf %27, %29 : vector<16x128xf32>
    %cst_23 = arith.constant dense<0xFF800000> : vector<16xf32>
    %31 = vector.multi_reduction <maximumf>, %30, %cst_23 [1] : vector<16x128xf32> to vector<16xf32>
    %32 = vector.shape_cast %31 : vector<16xf32> to vector<16x1xf32>
    %33 = vector.broadcast %32 : vector<16x1xf32> to vector<16x128xf32>
    %34 = arith.subf %30, %33 : vector<16x128xf32>
    %35 = math.exp %34 : vector<16x128xf32>
    %cst_24 = arith.constant dense<0.000000e+00> : vector<16xf32>
    %36 = vector.multi_reduction <add>, %35, %cst_24 [1] : vector<16x128xf32> to vector<16xf32>
    %37 = vector.shape_cast %36 : vector<16xf32> to vector<16x1xf32>
    %38 = math.log %37 : vector<16x1xf32>
    %39 = vector.broadcast %38 : vector<16x1xf32> to vector<16x128xf32>
    %40 = arith.subf %34, %39 : vector<16x128xf32>
    %41 = arith.truncf %40 : vector<16x128xf32> to vector<16x128xbf16>
    %c0_25 = arith.constant 0 : index
    %c0_26 = arith.constant 0 : index
    %42 = vector.load %arg10[%c0_25, %c0_26] : memref<16x128xbf16, #tpu.memory_space<vmem>>, vector<16x128xbf16>
    tpu.vector_store %arg10[%c0_25, %c0_26], %41 {strides = array<i32>} : memref<16x128xbf16, #tpu.memory_space<vmem>>, vector<16x128xbf16>,
    return
  }
  func.func @transform_0(%arg0: i32) -> (i32, i32) {
    %c0_i32 = arith.constant 0 : i32
    %c0_i32_0 = arith.constant 0 : i32
    return %arg0, %c0_i32 : i32, i32
  }
  func.func @transform_1(%arg0: i32) -> (i32, i32) {
    %c0_i32 = arith.constant 0 : i32
    %c0_i32_0 = arith.constant 0 : i32
    %c0_i32_1 = arith.constant 0 : i32
    return %c0_i32, %c0_i32_0 : i32, i32
  }
  func.func @transform_2(%arg0: i32) -> (i32, i32) {
    %c0_i32 = arith.constant 0 : i32
    %c0_i32_0 = arith.constant 0 : i32
    %c0_i32_1 = arith.constant 0 : i32
    return %c0_i32, %c0_i32_0 : i32, i32
  }
  func.func @transform_3(%arg0: i32) -> (i32, i32) {
    %c0_i32 = arith.constant 0 : i32
    %c0_i32_0 = arith.constant 0 : i32
    %c0_i32_1 = arith.constant 0 : i32
    return %c0_i32, %c0_i32_0 : i32, i32
  }
  func.func @transform_4(%arg0: i32) -> (i32, i32) {
    %c0_i32 = arith.constant 0 : i32
    %c0_i32_0 = arith.constant 0 : i32
    %c0_i32_1 = arith.constant 0 : i32
    return %c0_i32, %c0_i32_0 : i32, i32
  }
  func.func @transform_5(%arg0: i32) -> (i32, i32) {
    %c0_i32 = arith.constant 0 : i32
    %c0_i32_0 = arith.constant 0 : i32
    %c0_i32_1 = arith.constant 0 : i32
    return %c0_i32, %c0_i32_0 : i32, i32
  }
  func.func @transform_6(%arg0: i32) -> (i32, i32) {
    %c0_i32 = arith.constant 0 : i32
    %c0_i32_0 = arith.constant 0 : i32
    %c0_i32_1 = arith.constant 0 : i32
    return %c0_i32, %c0_i32_0 : i32, i32
  }
  func.func @transform_7(%arg0: i32) -> (i32, i32) {
    %c0_i32 = arith.constant 0 : i32
    %c0_i32_0 = arith.constant 0 : i32
    %c0_i32_1 = arith.constant 0 : i32
    return %c0_i32, %c0_i32_0 : i32, i32
  }
  func.func @transform_8(%arg0: i32) -> (i32, i32) {
    %c0_i32 = arith.constant 0 : i32
    %c0_i32_0 = arith.constant 0 : i32
    %c0_i32_1 = arith.constant 0 : i32
    return %c0_i32, %c0_i32_0 : i32, i32
  }
  func.func @transform_9(%arg0: i32) -> (i32, i32) {
    %c0_i32 = arith.constant 0 : i32
    %c0_i32_0 = arith.constant 0 : i32
    return %arg0, %c0_i32 : i32, i32
  }
}

</mosaic_0001>

<llo_original>
// kernel: tpu_custom_call.1
$region0: #{tpu_custom_call.1}
  #allocation0 [shape = 'u32[]', space=smem, size = 0x4, offset = 0x4, fixed_abs, tag = 'smem constant byte address 0x4 - core index']
  #allocation1 [shape = 'u32[144,128]{1,0:T(1,128)}', space=vmem, size = 0x12000, scoped, tag = 'internal scratch']
  %s0 = inlined_call_operand.vmem [shape: f32[2,784], index: 0, kind: input, shape index: {}]
  %s1 = inlined_call_operand.hbm [shape: bf16[784,256], index: 1, kind: input, shape index: {}]
  %s2 = inlined_call_operand.vmem [shape: f32[1,256], index: 2, kind: input, shape index: {}]
  %s3 = inlined_call_operand.hbm [shape: bf16[256,128], index: 3, kind: input, shape index: {}]
  %s4 = inlined_call_operand.vmem [shape: f32[1,128], index: 4, kind: input, shape index: {}]
  %s5 = inlined_call_operand.vmem [shape: bf16[128,64], index: 5, kind: input, shape index: {}]
  %s6 = inlined_call_operand.vmem [shape: f32[1,64], index: 6, kind: input, shape index: {}]
  %s7 = inlined_call_operand.vmem [shape: bf16[64,128], index: 7, kind: input, shape index: {}]
  %s8 = inlined_call_operand.vmem [shape: f32[1,128], index: 8, kind: input, shape index: {}]
  %s9 = inlined_call_operand.hbm [shape: bf16[2,128], index: 9, kind: output, shape index: {}]
  %s10 = sld [smem:[#allocation0]]
  $region54: #{tpu_custom_call.1} parent=0
    _
  %s12 = ssub.s32 1, %s10
  %s13 = scalar_select 0, %s12, %s10
  $region1: #{tpu_custom_call.1} parent=0
    #allocation2 [shape = 'u8[401408]{0}', space=vmem, size = 0x62000, scoped, tag = 'input window, operand 1, single buffered']
    #allocation3 [shape = 's32[1]{0}', space=sflag, size = 0x4, scoped, tag = 'scoped memory for tpu_custom_call.1']
    #allocation4 [shape = 's32[1]{0}', space=sflag, size = 0x4, scoped, tag = 'scoped memory for tpu_custom_call.1']
    #allocation5 [shape = 'u8[65536]{0}', space=vmem, size = 0x10000, scoped, tag = 'input window, operand 3, single buffered']
    #allocation6 [shape = 's32[1]{0}', space=sflag, size = 0x4, scoped, tag = 'scoped memory for tpu_custom_call.1']
    #allocation7 [shape = 'u8[4096]{0}', space=vmem, size = 0x1000, scoped, tag = 'output window, operand 0, single buffered']
    %14 = vsyncpa [#allocation3], 0
    %15 = vsyncpa [#allocation6], 0
    %16 = vsyncpa [#allocation4], 0
    // Predicated region
    $region2: #{tpu_custom_call.1} parent=1 // pred_check
      _
    $region3: #{tpu_custom_call.1} parent=1 // pred_check_branch
      %18 = sbr.rel (0) target = $region5
    $region4: #{tpu_custom_call.1} parent=1 // pred_region
      _
    $region5: #{tpu_custom_call.1} parent=1 // pred_fallthru
      _
    // Predicated region
    $region6: #{tpu_custom_call.1} parent=1 // pred_check
      _
    $region7: #{tpu_custom_call.1} parent=1 // pred_check_branch
      %20 = sbr.rel (0) target = $region9
    $region8: #{tpu_custom_call.1} parent=1 // pred_region
      %s22 = ssub.s32 12544, 12544
      %23 = vsyncadd [#allocation3], %s22
      %s24 = sshll.u32 [#allocation2], 4
      %s25 = int_to_ptr.vmem [resolvable:$true] %s24
      %30 = dma.hbm_to_vmem [thread:$0]  %s1, 12544, %s25, [#allocation3], 128, 128, 8
    $region9: #{tpu_custom_call.1} parent=1 // pred_fallthru
      _
    // Predicated region
    $region10: #{tpu_custom_call.1} parent=1 // pred_check
      _
    $region11: #{tpu_custom_call.1} parent=1 // pred_check_branch
      %32 = sbr.rel (0) target = $region13
    $region12: #{tpu_custom_call.1} parent=1 // pred_region
      _
    $region13: #{tpu_custom_call.1} parent=1 // pred_fallthru
      _
    // Predicated region
    $region14: #{tpu_custom_call.1} parent=1 // pred_check
      _
    $region15: #{tpu_custom_call.1} parent=1 // pred_check_branch
      %34 = sbr.rel (0) target = $region17
    $region16: #{tpu_custom_call.1} parent=1 // pred_region
      %s36 = ssub.s32 2048, 2048
      %37 = vsyncadd [#allocation6], %s36
      %s38 = sshll.u32 [#allocation5], 4
      %s39 = int_to_ptr.vmem [resolvable:$true] %s38
      %44 = dma.hbm_to_vmem [thread:$0]  %s3, 2048, %s39, [#allocation6], 64, 64, 4
    $region17: #{tpu_custom_call.1} parent=1 // pred_fallthru
      _
    // Predicated region
    $region18: #{tpu_custom_call.1} parent=1 // pred_check
      _
    $region19: #{tpu_custom_call.1} parent=1 // pred_check_branch
      %46 = sbr.rel (0) target = $region21
    $region20: #{tpu_custom_call.1} parent=1 // pred_region
      _
    $region21: #{tpu_custom_call.1} parent=1 // pred_fallthru
      _
    // Predicated region
    $region22: #{tpu_custom_call.1} parent=1 // pred_check
      _
    $region23: #{tpu_custom_call.1} parent=1 // pred_check_branch
      %48 = sbr.rel (0) target = $region25
    $region24: #{tpu_custom_call.1} parent=1 // pred_region
      _
    $region25: #{tpu_custom_call.1} parent=1 // pred_fallthru
      _
    // Predicated region
    $region26: #{tpu_custom_call.1} parent=1 // pred_check
      _
    $region27: #{tpu_custom_call.1} parent=1 // pred_check_branch
      %50 = sbr.rel (0) target = $region29
    $region28: #{tpu_custom_call.1} parent=1 // pred_region
      _
    $region29: #{tpu_custom_call.1} parent=1 // pred_fallthru
      _
    // Predicated region
    $region30: #{tpu_custom_call.1} parent=1 // pred_check
      _
    $region31: #{tpu_custom_call.1} parent=1 // pred_check_branch
      %52 = sbr.rel (0) target = $region33
    $region32: #{tpu_custom_call.1} parent=1 // pred_region
      _
    $region33: #{tpu_custom_call.1} parent=1 // pred_fallthru
      _
    // Predicated region
    $region34: #{tpu_custom_call.1} parent=1 // pred_check
      _
    $region35: #{tpu_custom_call.1} parent=1 // pred_check_branch
      %54 = sbr.rel (0) target = $region37
    $region36: #{tpu_custom_call.1} parent=1 // pred_region
      _
    $region37: #{tpu_custom_call.1} parent=1 // pred_fallthru
      _
    // Predicated region
    $region38: #{tpu_custom_call.1} parent=1 // pred_check
      _
    $region39: #{tpu_custom_call.1} parent=1 // pred_check_branch
      %56 = sbr.rel (0) target = $region41
    $region40: #{tpu_custom_call.1} parent=1 // pred_region
      %57 = dma.done [#allocation3], 12544
    $region41: #{tpu_custom_call.1} parent=1 // pred_fallthru
      _
    // Predicated region
    $region42: #{tpu_custom_call.1} parent=1 // pred_check
      _
    $region43: #{tpu_custom_call.1} parent=1 // pred_check_branch
      %59 = sbr.rel (0) target = $region45
    $region44: #{tpu_custom_call.1} parent=1 // pred_region
      %60 = dma.done [#allocation6], 2048
    $region45: #{tpu_custom_call.1} parent=1 // pred_fallthru
      _
    %v62 = vld [vmem:[%s0] sm:$0xff]
    %v63 = vld [vmem:[%s0 + $0x8] sm:$0x3f]
    %v64 = vld [vmem:[%s0 + $0xe] sm:$0xff]
    %v65 = vld [vmem:[%s0 + $0x16] sm:$0x3f]
    %v66 = vld [vmem:[%s0 + $0x1c] sm:$0xff]
    %v67 = vld [vmem:[%s0 + $0x24] sm:$0x3f]
    %v68 = vld [vmem:[%s0 + $0x2a] sm:$0xff]
    %v69 = vld [vmem:[%s0 + $0x32] sm:$0x3f]
    %v70 = vld [vmem:[%s0 + $0x38] sm:$0xff]
    %v71 = vld [vmem:[%s0 + $0x40] sm:$0x3f]
    %v72 = vld [vmem:[%s0 + $0x46] sm:$0xff]
    %v73 = vld [vmem:[%s0 + $0x4e] sm:$0x3f]
    %v74 = vld [vmem:[%s0 + $0x54] sm:$0xff]
    %v75 = vld [vmem:[%s0 + $0x5c] sm:$0x3f]
    %v76 = vld [vmem:[%s0 + $0x62] sm:$0xff]
    %v77 = vld [vmem:[%s0 + $0x6a] sm:$0x3f]
    %v94 = vcombine.low %v62, %v64
    %v95 = vcombine.high %v62, %v64
    %v96 = vcombine.low %v66, %v68
    %v97 = vcombine.high %v66, %v68
    %v99 = vunpack.c.l.s4 1983009808
    %v100 = vunpack.c.0.s8 %v99
    %v101 = vlaneseq
    %v102 = vshrl.u32 %v101, 7
    %v103 = vsub.s32 %v100, %v102
    %v104 = vrot.slane %v94, %v103
    %v106 = vunpack.c.l.s4 1983009808
    %v107 = vunpack.c.0.s8 %v106
    %v108 = vlaneseq
    %v109 = vshrl.u32 %v108, 7
    %v110 = vsub.s32 %v107, %v109
    %v111 = vrot.slane %v95, %v110
    %v113 = vunpack.c.l.s4 1983009808
    %v114 = vunpack.c.0.s8 %v113
    %v115 = vlaneseq
    %v116 = vshrl.u32 %v115, 7
    %v117 = vsub.s32 %v114, %v116
    %v118 = vrot.slane %v96, %v117
    %v120 = vunpack.c.l.s4 1983009808
    %v121 = vunpack.c.0.s8 %v120
    %v122 = vlaneseq
    %v123 = vshrl.u32 %v122, 7
    %v124 = vsub.s32 %v121, %v123
    %v125 = vrot.slane %v97, %v124
    %v126 = vcombine.low %v104, %v118
    %v127 = vcombine.high %v104, %v118
    %v128 = vcombine.low %v111, %v125
    %v129 = vcombine.high %v111, %v125
    %v130 = vcombine.low %v63, %v65
    %v131 = vcombine.high %v63, %v65
    %v132 = vcombine.low %v67, %v69
    %v133 = vcombine.high %v67, %v69
    %v135 = vunpack.c.l.s4 1983009808
    %v136 = vunpack.c.0.s8 %v135
    %v137 = vlaneseq
    %v138 = vshrl.u32 %v137, 7
    %v139 = vsub.s32 %v136, %v138
    %v140 = vrot.slane %v130, %v139
    %v142 = vunpack.c.l.s4 1983009808
    %v143 = vunpack.c.0.s8 %v142
    %v144 = vlaneseq
    %v145 = vshrl.u32 %v144, 7
    %v146 = vsub.s32 %v143, %v145
    %v147 = vrot.slane %v131, %v146
    %v149 = vunpack.c.l.s4 1983009808
    %v150 = vunpack.c.0.s8 %v149
    %v151 = vlaneseq
    %v152 = vshrl.u32 %v151, 7
    %v153 = vsub.s32 %v150, %v152
    %v154 = vrot.slane %v132, %v153
    %v156 = vunpack.c.l.s4 1983009808
    %v157 = vunpack.c.0.s8 %v156
    %v158 = vlaneseq
    %v159 = vshrl.u32 %v158, 7
    %v160 = vsub.s32 %v157, %v159
    %v161 = vrot.slane %v133, %v160
    %v162 = vcombine.low %v140, %v154
    %v163 = vcombine.high %v140, %v154
    %v164 = vcombine.low %v147, %v161
    %v165 = vcombine.low %v70, %v72
    %v166 = vcombine.high %v70, %v72
    %v167 = vcombine.low %v74, %v76
    %v168 = vcombine.high %v74, %v76
    %v170 = vunpack.c.l.s4 1983009808
    %v171 = vunpack.c.0.s8 %v170
    %v172 = vlaneseq
    %v173 = vshrl.u32 %v172, 7
    %v174 = vsub.s32 %v171, %v173
    %v175 = vrot.slane %v165, %v174
    %v177 = vunpack.c.l.s4 1983009808
    %v178 = vunpack.c.0.s8 %v177
    %v179 = vlaneseq
    %v180 = vshrl.u32 %v179, 7
    %v181 = vsub.s32 %v178, %v180
    %v182 = vrot.slane %v166, %v181
    %v184 = vunpack.c.l.s4 1983009808
    %v185 = vunpack.c.0.s8 %v184
    %v186 = vlaneseq
    %v187 = vshrl.u32 %v186, 7
    %v188 = vsub.s32 %v185, %v187
    %v189 = vrot.slane %v167, %v188
    %v191 = vunpack.c.l.s4 1983009808
    %v192 = vunpack.c.0.s8 %v191
    %v193 = vlaneseq
    %v194 = vshrl.u32 %v193, 7
    %v195 = vsub.s32 %v192, %v194
    %v196 = vrot.slane %v168, %v195
    %v197 = vcombine.low %v175, %v189
    %v198 = vcombine.high %v175, %v189
    %v199 = vcombine.low %v182, %v196
    %v200 = vcombine.high %v182, %v196
    %v201 = vcombine.low %v71, %v73
    %v202 = vcombine.high %v71, %v73
    %v203 = vcombine.low %v75, %v77
    %v204 = vcombine.high %v75, %v77
    %v206 = vunpack.c.l.s4 1983009808
    %v207 = vunpack.c.0.s8 %v206
    %v208 = vlaneseq
    %v209 = vshrl.u32 %v208, 7
    %v210 = vsub.s32 %v207, %v209
    %v211 = vrot.slane %v201, %v210
    %v213 = vunpack.c.l.s4 1983009808
    %v214 = vunpack.c.0.s8 %v213
    %v215 = vlaneseq
    %v216 = vshrl.u32 %v215, 7
    %v217 = vsub.s32 %v214, %v216
    %v218 = vrot.slane %v202, %v217
    %v220 = vunpack.c.l.s4 1983009808
    %v221 = vunpack.c.0.s8 %v220
    %v222 = vlaneseq
    %v223 = vshrl.u32 %v222, 7
    %v224 = vsub.s32 %v221, %v223
    %v225 = vrot.slane %v203, %v224
    %v227 = vunpack.c.l.s4 1983009808
    %v228 = vunpack.c.0.s8 %v227
    %v229 = vlaneseq
    %v230 = vshrl.u32 %v229, 7
    %v231 = vsub.s32 %v228, %v230
    %v232 = vrot.slane %v204, %v231
    %v233 = vcombine.low %v211, %v225
    %v234 = vcombine.high %v211, %v225
    %v235 = vcombine.low %v218, %v232
    %v250 = vpack.c.bf16 %v197, %v126
    %v251 = vpack.c.bf16 %v198, %v127
    %v252 = vpack.c.bf16 %v199, %v128
    %v253 = vpack.c.bf16 %v200, %v129
    %v254 = vpack.c.bf16 %v233, %v162
    %v255 = vpack.c.bf16 %v234, %v163
    %v256 = vpack.c.bf16 %v235, %v164
    %v257 = vld [vmem:[#allocation2] sm:$0xff]
    %v258 = vld [vmem:[#allocation2 + $0x8] sm:$0xff]
    %v259 = vld [vmem:[#allocation2 + $0x10] sm:$0xff]
    %v260 = vld [vmem:[#allocation2 + $0x18] sm:$0xff]
    %v261 = vld [vmem:[#allocation2 + $0x20] sm:$0xff]
    %v262 = vld [vmem:[#allocation2 + $0x28] sm:$0xff]
    %v263 = vld [vmem:[#allocation2 + $0x30] sm:$0xff]
    %v264 = vld [vmem:[#allocation2 + $0x38] sm:$0xff]
    %v265 = vld [vmem:[#allocation2 + $0x40] sm:$0xff]
    %v266 = vld [vmem:[#allocation2 + $0x48] sm:$0xff]
    %v267 = vld [vmem:[#allocation2 + $0x50] sm:$0xff]
    %v268 = vld [vmem:[#allocation2 + $0x58] sm:$0xff]
    %v269 = vld [vmem:[#allocation2 + $0x60] sm:$0xff]
    %v270 = vld [vmem:[#allocation2 + $0x68] sm:$0xff]
    %v271 = vld [vmem:[#allocation2 + $0x70] sm:$0xff]
    %v272 = vld [vmem:[#allocation2 + $0x78] sm:$0xff]
    %v273 = vld [vmem:[#allocation2 + $0x80] sm:$0xff]
    %v274 = vld [vmem:[#allocation2 + $0x88] sm:$0xff]
    %v275 = vld [vmem:[#allocation2 + $0x90] sm:$0xff]
    %v276 = vld [vmem:[#allocation2 + $0x98] sm:$0xff]
    %v277 = vld [vmem:[#allocation2 + $0xa0] sm:$0xff]
    %v278 = vld [vmem:[#allocation2 + $0xa8] sm:$0xff]
    %v279 = vld [vmem:[#allocation2 + $0xb0] sm:$0xff]
    %v280 = vld [vmem:[#allocation2 + $0xb8] sm:$0xff]
    %v281 = vld [vmem:[#allocation2 + $0xc0] sm:$0xff]
    %v282 = vld [vmem:[#allocation2 + $0xc8] sm:$0xff]
    %v283 = vld [vmem:[#allocation2 + $0xd0] sm:$0xff]
    %v284 = vld [vmem:[#allocation2 + $0xd8] sm:$0xff]
    %v285 = vld [vmem:[#allocation2 + $0xe0] sm:$0xff]
    %v286 = vld [vmem:[#allocation2 + $0xe8] sm:$0xff]
    %v287 = vld [vmem:[#allocation2 + $0xf0] sm:$0xff]
    %v288 = vld [vmem:[#allocation2 + $0xf8] sm:$0xff]
    %v289 = vld [vmem:[#allocation2 + $0x100] sm:$0xff]
    %v290 = vld [vmem:[#allocation2 + $0x108] sm:$0xff]
    %v291 = vld [vmem:[#allocation2 + $0x110] sm:$0xff]
    %v292 = vld [vmem:[#allocation2 + $0x118] sm:$0xff]
    %v293 = vld [vmem:[#allocation2 + $0x120] sm:$0xff]
    %v294 = vld [vmem:[#allocation2 + $0x128] sm:$0xff]
    %v295 = vld [vmem:[#allocation2 + $0x130] sm:$0xff]
    %v296 = vld [vmem:[#allocation2 + $0x138] sm:$0xff]
    %v297 = vld [vmem:[#allocation2 + $0x140] sm:$0xff]
    %v298 = vld [vmem:[#allocation2 + $0x148] sm:$0xff]
    %v299 = vld [vmem:[#allocation2 + $0x150] sm:$0xff]
    %v300 = vld [vmem:[#allocation2 + $0x158] sm:$0xff]
    %v301 = vld [vmem:[#allocation2 + $0x160] sm:$0xff]
    %v302 = vld [vmem:[#allocation2 + $0x168] sm:$0xff]
    %v303 = vld [vmem:[#allocation2 + $0x170] sm:$0xff]
    %v304 = vld [vmem:[#allocation2 + $0x178] sm:$0xff]
    %v305 = vld [vmem:[#allocation2 + $0x180] sm:$0xff]
    %v306 = vld [vmem:[#allocation2 + $0x188] sm:$0xff]
    %v307 = vld [vmem:[#allocation2 + $0x190] sm:$0xff]
    %v308 = vld [vmem:[#allocation2 + $0x198] sm:$0xff]
    %v309 = vld [vmem:[#allocation2 + $0x1a0] sm:$0xff]
    %v310 = vld [vmem:[#allocation2 + $0x1a8] sm:$0xff]
    %v311 = vld [vmem:[#allocation2 + $0x1b0] sm:$0xff]
    %v312 = vld [vmem:[#allocation2 + $0x1b8] sm:$0xff]
    %v313 = vld [vmem:[#allocation2 + $0x1c0] sm:$0xff]
    %v314 = vld [vmem:[#allocation2 + $0x1c8] sm:$0xff]
    %v315 = vld [vmem:[#allocation2 + $0x1d0] sm:$0xff]
    %v316 = vld [vmem:[#allocation2 + $0x1d8] sm:$0xff]
    %v317 = vld [vmem:[#allocation2 + $0x1e0] sm:$0xff]
    %v318 = vld [vmem:[#allocation2 + $0x1e8] sm:$0xff]
    %v319 = vld [vmem:[#allocation2 + $0x1f0] sm:$0xff]
    %v320 = vld [vmem:[#allocation2 + $0x1f8] sm:$0xff]
    %v321 = vld [vmem:[#allocation2 + $0x200] sm:$0xff]
    %v322 = vld [vmem:[#allocation2 + $0x208] sm:$0xff]
    %v323 = vld [vmem:[#allocation2 + $0x210] sm:$0xff]
    %v324 = vld [vmem:[#allocation2 + $0x218] sm:$0xff]
    %v325 = vld [vmem:[#allocation2 + $0x220] sm:$0xff]
    %v326 = vld [vmem:[#allocation2 + $0x228] sm:$0xff]
    %v327 = vld [vmem:[#allocation2 + $0x230] sm:$0xff]
    %v328 = vld [vmem:[#allocation2 + $0x238] sm:$0xff]
    %v329 = vld [vmem:[#allocation2 + $0x240] sm:$0xff]
    %v330 = vld [vmem:[#allocation2 + $0x248] sm:$0xff]
    %v331 = vld [vmem:[#allocation2 + $0x250] sm:$0xff]
    %v332 = vld [vmem:[#allocation2 + $0x258] sm:$0xff]
    %v333 = vld [vmem:[#allocation2 + $0x260] sm:$0xff]
    %v334 = vld [vmem:[#allocation2 + $0x268] sm:$0xff]
    %v335 = vld [vmem:[#allocation2 + $0x270] sm:$0xff]
    %v336 = vld [vmem:[#allocation2 + $0x278] sm:$0xff]
    %v337 = vld [vmem:[#allocation2 + $0x280] sm:$0xff]
    %v338 = vld [vmem:[#allocation2 + $0x288] sm:$0xff]
    %v339 = vld [vmem:[#allocation2 + $0x290] sm:$0xff]
    %v340 = vld [vmem:[#allocation2 + $0x298] sm:$0xff]
    %v341 = vld [vmem:[#allocation2 + $0x2a0] sm:$0xff]
    %v342 = vld [vmem:[#allocation2 + $0x2a8] sm:$0xff]
    %v343 = vld [vmem:[#allocation2 + $0x2b0] sm:$0xff]
    %v344 = vld [vmem:[#allocation2 + $0x2b8] sm:$0xff]
    %v345 = vld [vmem:[#allocation2 + $0x2c0] sm:$0xff]
    %v346 = vld [vmem:[#allocation2 + $0x2c8] sm:$0xff]
    %v347 = vld [vmem:[#allocation2 + $0x2d0] sm:$0xff]
    %v348 = vld [vmem:[#allocation2 + $0x2d8] sm:$0xff]
    %v349 = vld [vmem:[#allocation2 + $0x2e0] sm:$0xff]
    %v350 = vld [vmem:[#allocation2 + $0x2e8] sm:$0xff]
    %v351 = vld [vmem:[#allocation2 + $0x2f0] sm:$0xff]
    %v352 = vld [vmem:[#allocation2 + $0x2f8] sm:$0xff]
    %v353 = vld [vmem:[#allocation2 + $0x300] sm:$0xff]
    %v354 = vld [vmem:[#allocation2 + $0x308] sm:$0xff]
    %v355 = vld [vmem:[%s2] sm:$0x3]
    %v357 = vlaneseq
    %v358 = vshrl.u32 %v357, 7
    %v359 = vsub.s32 0, %v358
    %v360 = vrot.slane %v355, %v359
    %v361 = vlaneseq
    %v362 = vshrl.u32 %v361, 7
    %v363 = vsub.s32 1, %v362
    %v364 = vrot.slane %v355, %v363
    %v465 = vunpack.c.l.b16 %v257
    %v466 = vunpack.c.h.b16 %v257
    %v467 = vunpack.c.l.b16 %v258
    %v468 = vunpack.c.h.b16 %v258
    %v469 = vunpack.c.l.b16 %v259
    %v470 = vunpack.c.h.b16 %v259
    %v471 = vunpack.c.l.b16 %v260
    %v472 = vunpack.c.h.b16 %v260
    %v473 = vunpack.c.l.b16 %v261
    %v474 = vunpack.c.h.b16 %v261
    %v475 = vunpack.c.l.b16 %v262
    %v476 = vunpack.c.h.b16 %v262
    %v477 = vunpack.c.l.b16 %v263
    %v478 = vunpack.c.h.b16 %v263
    %v479 = vunpack.c.l.b16 %v264
    %v480 = vunpack.c.h.b16 %v264
    %v481 = vunpack.c.l.b16 %v265
    %v482 = vunpack.c.h.b16 %v265
    %v483 = vunpack.c.l.b16 %v266
    %v484 = vunpack.c.h.b16 %v266
    %v485 = vunpack.c.l.b16 %v267
    %v486 = vunpack.c.h.b16 %v267
    %v487 = vunpack.c.l.b16 %v268
    %v488 = vunpack.c.h.b16 %v268
    %v489 = vunpack.c.l.b16 %v269
    %v490 = vunpack.c.h.b16 %v269
    %v491 = vunpack.c.l.b16 %v270
    %v492 = vunpack.c.h.b16 %v270
    %v493 = vunpack.c.l.b16 %v271
    %v494 = vunpack.c.h.b16 %v271
    %v495 = vunpack.c.l.b16 %v272
    %v496 = vunpack.c.h.b16 %v272
    %v497 = vunpack.c.l.b16 %v273
    %v498 = vunpack.c.h.b16 %v273
    %v499 = vunpack.c.l.b16 %v274
    %v500 = vunpack.c.h.b16 %v274
    %v501 = vunpack.c.l.b16 %v275
    %v502 = vunpack.c.h.b16 %v275
    %v503 = vunpack.c.l.b16 %v276
    %v504 = vunpack.c.h.b16 %v276
    %v505 = vunpack.c.l.b16 %v277
    %v506 = vunpack.c.h.b16 %v277
    %v507 = vunpack.c.l.b16 %v278
    %v508 = vunpack.c.h.b16 %v278
    %v509 = vunpack.c.l.b16 %v279
    %v510 = vunpack.c.h.b16 %v279
    %v511 = vunpack.c.l.b16 %v280
    %v512 = vunpack.c.h.b16 %v280
    %v513 = vunpack.c.l.b16 %v281
    %v514 = vunpack.c.h.b16 %v281
    %v515 = vunpack.c.l.b16 %v282
    %v516 = vunpack.c.h.b16 %v282
    %v517 = vunpack.c.l.b16 %v283
    %v518 = vunpack.c.h.b16 %v283
    %v519 = vunpack.c.l.b16 %v284
    %v520 = vunpack.c.h.b16 %v284
    %v521 = vunpack.c.l.b16 %v285
    %v522 = vunpack.c.h.b16 %v285
    %v523 = vunpack.c.l.b16 %v286
    %v524 = vunpack.c.h.b16 %v286
    %v525 = vunpack.c.l.b16 %v287
    %v526 = vunpack.c.h.b16 %v287
    %v527 = vunpack.c.l.b16 %v288
    %v528 = vunpack.c.h.b16 %v288
    %v529 = vunpack.c.l.b16 %v289
    %v530 = vunpack.c.h.b16 %v289
    %v531 = vunpack.c.l.b16 %v290
    %v532 = vunpack.c.h.b16 %v290
    %v533 = vunpack.c.l.b16 %v291
    %v534 = vunpack.c.h.b16 %v291
    %v535 = vunpack.c.l.b16 %v292
    %v536 = vunpack.c.h.b16 %v292
    %v537 = vunpack.c.l.b16 %v293
    %v538 = vunpack.c.h.b16 %v293
    %v539 = vunpack.c.l.b16 %v294
    %v540 = vunpack.c.h.b16 %v294
    %v541 = vunpack.c.l.b16 %v295
    %v542 = vunpack.c.h.b16 %v295
    %v543 = vunpack.c.l.b16 %v296
    %v544 = vunpack.c.h.b16 %v296
    %v545 = vunpack.c.l.b16 %v297
    %v546 = vunpack.c.h.b16 %v297
    %v547 = vunpack.c.l.b16 %v298
    %v548 = vunpack.c.h.b16 %v298
    %v549 = vunpack.c.l.b16 %v299
    %v550 = vunpack.c.h.b16 %v299
    %v551 = vunpack.c.l.b16 %v300
    %v552 = vunpack.c.h.b16 %v300
    %v553 = vunpack.c.l.b16 %v301
    %v554 = vunpack.c.h.b16 %v301
    %v555 = vunpack.c.l.b16 %v302
    %v556 = vunpack.c.h.b16 %v302
    %v557 = vunpack.c.l.b16 %v303
    %v558 = vunpack.c.h.b16 %v303
    %v559 = vunpack.c.l.b16 %v304
    %v560 = vunpack.c.h.b16 %v304
    %v561 = vunpack.c.l.b16 %v305
    %v562 = vunpack.c.h.b16 %v305
    %v563 = vunpack.c.l.b16 %v306
    %v564 = vunpack.c.h.b16 %v306
    %v565 = vunpack.c.l.b16 %v307
    %v566 = vunpack.c.h.b16 %v307
    %v567 = vunpack.c.l.b16 %v308
    %v568 = vunpack.c.h.b16 %v308
    %v569 = vunpack.c.l.b16 %v309
    %v570 = vunpack.c.h.b16 %v309
    %v571 = vunpack.c.l.b16 %v310
    %v572 = vunpack.c.h.b16 %v310
    %v573 = vunpack.c.l.b16 %v311
    %v574 = vunpack.c.h.b16 %v311
    %v575 = vunpack.c.l.b16 %v312
    %v576 = vunpack.c.h.b16 %v312
    %v577 = vunpack.c.l.b16 %v313
    %v578 = vunpack.c.h.b16 %v313
    %v579 = vunpack.c.l.b16 %v314
    %v580 = vunpack.c.h.b16 %v314
    %v581 = vunpack.c.l.b16 %v315
    %v582 = vunpack.c.h.b16 %v315
    %v583 = vunpack.c.l.b16 %v316
    %v584 = vunpack.c.h.b16 %v316
    %v585 = vunpack.c.l.b16 %v317
    %v586 = vunpack.c.h.b16 %v317
    %v587 = vunpack.c.l.b16 %v318
    %v588 = vunpack.c.h.b16 %v318
    %v589 = vunpack.c.l.b16 %v319
    %v590 = vunpack.c.h.b16 %v319
    %v591 = vunpack.c.l.b16 %v320
    %v592 = vunpack.c.h.b16 %v320
    %v593 = vunpack.c.l.b16 %v321
    %v594 = vunpack.c.h.b16 %v321
    %v595 = vunpack.c.l.b16 %v322
    %v596 = vunpack.c.h.b16 %v322
    %v597 = vunpack.c.l.b16 %v323
    %v598 = vunpack.c.h.b16 %v323
    %v599 = vunpack.c.l.b16 %v324
    %v600 = vunpack.c.h.b16 %v324
    %v601 = vunpack.c.l.b16 %v325
    %v602 = vunpack.c.h.b16 %v325
    %v603 = vunpack.c.l.b16 %v326
    %v604 = vunpack.c.h.b16 %v326
    %v605 = vunpack.c.l.b16 %v327
    %v606 = vunpack.c.h.b16 %v327
    %v607 = vunpack.c.l.b16 %v328
    %v608 = vunpack.c.h.b16 %v328
    %v609 = vunpack.c.l.b16 %v329
    %v610 = vunpack.c.h.b16 %v329
    %v611 = vunpack.c.l.b16 %v330
    %v612 = vunpack.c.h.b16 %v330
    %v613 = vunpack.c.l.b16 %v331
    %v614 = vunpack.c.h.b16 %v331
    %v615 = vunpack.c.l.b16 %v332
    %v616 = vunpack.c.h.b16 %v332
    %v617 = vunpack.c.l.b16 %v333
    %v618 = vunpack.c.h.b16 %v333
    %v619 = vunpack.c.l.b16 %v334
    %v620 = vunpack.c.h.b16 %v334
    %v621 = vunpack.c.l.b16 %v335
    %v622 = vunpack.c.h.b16 %v335
    %v623 = vunpack.c.l.b16 %v336
    %v624 = vunpack.c.h.b16 %v336
    %v625 = vunpack.c.l.b16 %v337
    %v626 = vunpack.c.h.b16 %v337
    %v627 = vunpack.c.l.b16 %v338
    %v628 = vunpack.c.h.b16 %v338
    %v629 = vunpack.c.l.b16 %v339
    %v630 = vunpack.c.h.b16 %v339
    %v631 = vunpack.c.l.b16 %v340
    %v632 = vunpack.c.h.b16 %v340
    %v633 = vunpack.c.l.b16 %v341
    %v634 = vunpack.c.h.b16 %v341
    %v635 = vunpack.c.l.b16 %v342
    %v636 = vunpack.c.h.b16 %v342
    %v637 = vunpack.c.l.b16 %v343
    %v638 = vunpack.c.h.b16 %v343
    %v639 = vunpack.c.l.b16 %v344
    %v640 = vunpack.c.h.b16 %v344
    %v641 = vunpack.c.l.b16 %v345
    %v642 = vunpack.c.h.b16 %v345
    %v643 = vunpack.c.l.b16 %v346
    %v644 = vunpack.c.h.b16 %v346
    %v645 = vunpack.c.l.b16 %v347
    %v646 = vunpack.c.h.b16 %v347
    %v647 = vunpack.c.l.b16 %v348
    %v648 = vunpack.c.h.b16 %v348
    %v649 = vunpack.c.l.b16 %v349
    %v650 = vunpack.c.h.b16 %v349
    %v651 = vunpack.c.l.b16 %v350
    %v652 = vunpack.c.h.b16 %v350
    %v653 = vunpack.c.l.b16 %v351
    %v654 = vunpack.c.h.b16 %v351
    %v655 = vunpack.c.l.b16 %v352
    %v656 = vunpack.c.h.b16 %v352
    %v657 = vunpack.c.l.b16 %v353
    %v658 = vunpack.c.h.b16 %v353
    %v659 = vunpack.c.l.b16 %v354
    %v660 = vunpack.c.h.b16 %v354
    %v661 = vpack.c.b16 %v467, %v465
    %v662 = vpack.c.b16 %v468, %v466
    %v663 = vpack.c.b16 %v471, %v469
    %v664 = vpack.c.b16 %v472, %v470
    %v665 = vpack.c.b16 %v475, %v473
    %v666 = vpack.c.b16 %v476, %v474
    %v667 = vpack.c.b16 %v479, %v477
    %v668 = vpack.c.b16 %v480, %v478
    %v669 = vpack.c.b16 %v483, %v481
    %v670 = vpack.c.b16 %v484, %v482
    %v671 = vpack.c.b16 %v487, %v485
    %v672 = vpack.c.b16 %v488, %v486
    %v673 = vpack.c.b16 %v491, %v489
    %v674 = vpack.c.b16 %v492, %v490
    %v675 = vpack.c.b16 %v495, %v493
    %v676 = vpack.c.b16 %v496, %v494
    %v677 = vpack.c.b16 %v499, %v497
    %v678 = vpack.c.b16 %v500, %v498
    %v679 = vpack.c.b16 %v503, %v501
    %v680 = vpack.c.b16 %v504, %v502
    %v681 = vpack.c.b16 %v507, %v505
    %v682 = vpack.c.b16 %v508, %v506
    %v683 = vpack.c.b16 %v511, %v509
    %v684 = vpack.c.b16 %v512, %v510
    %v685 = vpack.c.b16 %v515, %v513
    %v686 = vpack.c.b16 %v516, %v514
    %v687 = vpack.c.b16 %v519, %v517
    %v688 = vpack.c.b16 %v520, %v518
    %v689 = vpack.c.b16 %v523, %v521
    %v690 = vpack.c.b16 %v524, %v522
    %v691 = vpack.c.b16 %v527, %v525
    %v692 = vpack.c.b16 %v528, %v526
    %v693 = vpack.c.b16 %v531, %v529
    %v694 = vpack.c.b16 %v532, %v530
    %v695 = vpack.c.b16 %v535, %v533
    %v696 = vpack.c.b16 %v536, %v534
    %v697 = vpack.c.b16 %v539, %v537
    %v698 = vpack.c.b16 %v540, %v538
    %v699 = vpack.c.b16 %v543, %v541
    %v700 = vpack.c.b16 %v544, %v542
    %v701 = vpack.c.b16 %v547, %v545
    %v702 = vpack.c.b16 %v548, %v546
    %v703 = vpack.c.b16 %v551, %v549
    %v704 = vpack.c.b16 %v552, %v550
    %v705 = vpack.c.b16 %v555, %v553
    %v706 = vpack.c.b16 %v556, %v554
    %v707 = vpack.c.b16 %v559, %v557
    %v708 = vpack.c.b16 %v560, %v558
    %v709 = vpack.c.b16 %v563, %v561
    %v710 = vpack.c.b16 %v564, %v562
    %v711 = vpack.c.b16 %v567, %v565
    %v712 = vpack.c.b16 %v568, %v566
    %v713 = vpack.c.b16 %v571, %v569
    %v714 = vpack.c.b16 %v572, %v570
    %v715 = vpack.c.b16 %v575, %v573
    %v716 = vpack.c.b16 %v576, %v574
    %v717 = vpack.c.b16 %v579, %v577
    %v718 = vpack.c.b16 %v580, %v578
    %v719 = vpack.c.b16 %v583, %v581
    %v720 = vpack.c.b16 %v584, %v582
    %v721 = vpack.c.b16 %v587, %v585
    %v722 = vpack.c.b16 %v588, %v586
    %v723 = vpack.c.b16 %v591, %v589
    %v724 = vpack.c.b16 %v592, %v590
    %v725 = vpack.c.b16 %v595, %v593
    %v726 = vpack.c.b16 %v596, %v594
    %v727 = vpack.c.b16 %v599, %v597
    %v728 = vpack.c.b16 %v600, %v598
    %v729 = vpack.c.b16 %v603, %v601
    %v730 = vpack.c.b16 %v604, %v602
    %v731 = vpack.c.b16 %v607, %v605
    %v732 = vpack.c.b16 %v608, %v606
    %v733 = vpack.c.b16 %v611, %v609
    %v734 = vpack.c.b16 %v612, %v610
    %v735 = vpack.c.b16 %v615, %v613
    %v736 = vpack.c.b16 %v616, %v614
    %v737 = vpack.c.b16 %v619, %v617
    %v738 = vpack.c.b16 %v620, %v618
    %v739 = vpack.c.b16 %v623, %v621
    %v740 = vpack.c.b16 %v624, %v622
    %v741 = vpack.c.b16 %v627, %v625
    %v742 = vpack.c.b16 %v628, %v626
    %v743 = vpack.c.b16 %v631, %v629
    %v744 = vpack.c.b16 %v632, %v630
    %v745 = vpack.c.b16 %v635, %v633
    %v746 = vpack.c.b16 %v636, %v634
    %v747 = vpack.c.b16 %v639, %v637
    %v748 = vpack.c.b16 %v640, %v638
    %v749 = vpack.c.b16 %v643, %v641
    %v750 = vpack.c.b16 %v644, %v642
    %v751 = vpack.c.b16 %v647, %v645
    %v752 = vpack.c.b16 %v648, %v646
    %v753 = vpack.c.b16 %v651, %v649
    %v754 = vpack.c.b16 %v652, %v650
    %v755 = vpack.c.b16 %v655, %v653
    %v756 = vpack.c.b16 %v656, %v654
    %v757 = vpack.c.b16 %v659, %v657
    %v758 = vpack.c.b16 %v660, %v658
    %vm857 = vcmask 130048
    %v859 = vsel %vm857, %v256, 0
    %861 = vmatprep.subr.bf16.mxu0 %v662
    %862 = vmatpush1.bf16.msra.mxu0 %v661
    %863 = vmatprep.subr.bf16.mxu0 %v664
    %864 = vmatpush1.bf16.msra.mxu0 %v663
    %865 = vmatprep.subr.bf16.mxu0 %v666
    %866 = vmatpush1.bf16.msra.mxu0 %v665
    %867 = vmatprep.subr.bf16.mxu0 %v668
    %868 = vmatpush1.bf16.msra.mxu0 %v667
    %869 = vmatprep.subr.bf16.mxu0 %v670
    %870 = vmatpush1.bf16.msra.mxu0 %v669
    %871 = vmatprep.subr.bf16.mxu0 %v672
    %872 = vmatpush1.bf16.msra.mxu0 %v671
    %873 = vmatprep.subr.bf16.mxu0 %v674
    %874 = vmatpush1.bf16.msra.mxu0 %v673
    %875 = vmatprep.subr.bf16.mxu0 %v676
    %876 = vmatpush1.bf16.msra.mxu0 %v675
    %877 = vmatprep.subr.bf16.mxu0 %v678
    %878 = vmatpush1.bf16.msra.mxu0 %v677
    %879 = vmatprep.subr.bf16.mxu0 %v680
    %880 = vmatpush1.bf16.msra.mxu0 %v679
    %881 = vmatprep.subr.bf16.mxu0 %v682
    %882 = vmatpush1.bf16.msra.mxu0 %v681
    %883 = vmatprep.subr.bf16.mxu0 %v684
    %884 = vmatpush1.bf16.msra.mxu0 %v683
    %885 = vmatprep.subr.bf16.mxu0 %v686
    %886 = vmatpush1.bf16.msra.mxu0 %v685
    %887 = vmatprep.subr.bf16.mxu0 %v688
    %888 = vmatpush1.bf16.msra.mxu0 %v687
    %889 = vmatprep.subr.bf16.mxu0 %v690
    %890 = vmatpush1.bf16.msra.mxu0 %v689
    %891 = vmatprep.subr.bf16.mxu0 %v692
    %892 = vmatpush1.bf16.msra.mxu0 %v691
    %893 = vmatprep.mubr.bf16.mxu0 %v251
    %894 = vmatmul.mubr.bf16.gmra.mrb[0].mxu0 %v250
    %v895 = vpop.f32.mrb[0].mxu0
    %v896 = vadd.f32 %v360, %v895
    %v897 = vpop.f32.mrb[0].mxu0
    %v898 = vadd.f32 %v364, %v897
    %v899 = vpop.f32.mrb[0].mxu0
    %v900 = vadd.f32 %v360, %v899
    %v901 = vpop.f32.mrb[0].mxu0
    %v902 = vadd.f32 %v364, %v901
    %903 = vdwg.mxu0
    %904 = vmatprep.subr.bf16.mxu0 %v694
    %905 = vmatpush1.bf16.msra.mxu0 %v693
    %906 = vmatprep.subr.bf16.mxu0 %v696
    %907 = vmatpush1.bf16.msra.mxu0 %v695
    %908 = vmatprep.subr.bf16.mxu0 %v698
    %909 = vmatpush1.bf16.msra.mxu0 %v697
    %910 = vmatprep.subr.bf16.mxu0 %v700
    %911 = vmatpush1.bf16.msra.mxu0 %v699
    %912 = vmatprep.subr.bf16.mxu0 %v702
    %913 = vmatpush1.bf16.msra.mxu0 %v701
    %914 = vmatprep.subr.bf16.mxu0 %v704
    %915 = vmatpush1.bf16.msra.mxu0 %v703
    %916 = vmatprep.subr.bf16.mxu0 %v706
    %917 = vmatpush1.bf16.msra.mxu0 %v705
    %918 = vmatprep.subr.bf16.mxu0 %v708
    %919 = vmatpush1.bf16.msra.mxu0 %v707
    %920 = vmatprep.subr.bf16.mxu0 %v710
    %921 = vmatpush1.bf16.msra.mxu0 %v709
    %922 = vmatprep.subr.bf16.mxu0 %v712
    %923 = vmatpush1.bf16.msra.mxu0 %v711
    %924 = vmatprep.subr.bf16.mxu0 %v714
    %925 = vmatpush1.bf16.msra.mxu0 %v713
    %926 = vmatprep.subr.bf16.mxu0 %v716
    %927 = vmatpush1.bf16.msra.mxu0 %v715
    %928 = vmatprep.subr.bf16.mxu0 %v718
    %929 = vmatpush1.bf16.msra.mxu0 %v717
    %930 = vmatprep.subr.bf16.mxu0 %v720
    %931 = vmatpush1.bf16.msra.mxu0 %v719
    %932 = vmatprep.subr.bf16.mxu0 %v722
    %933 = vmatpush1.bf16.msra.mxu0 %v721
    %934 = vmatprep.subr.bf16.mxu0 %v724
    %935 = vmatpush1.bf16.msra.mxu0 %v723
    %936 = vmatprep.mubr.bf16.mxu0 %v253
    %937 = vmatmul.mubr.bf16.gmra.mrb[0].mxu0 %v252
    %v938 = vpop.f32.mrb[0].mxu0
    %v939 = vadd.f32 %v896, %v938
    %v940 = vpop.f32.mrb[0].mxu0
    %v941 = vadd.f32 %v898, %v940
    %v942 = vpop.f32.mrb[0].mxu0
    %v943 = vadd.f32 %v900, %v942
    %v944 = vpop.f32.mrb[0].mxu0
    %v945 = vadd.f32 %v902, %v944
    %946 = vdwg.mxu0
    %947 = vmatprep.subr.bf16.mxu0 %v726
    %948 = vmatpush1.bf16.msra.mxu0 %v725
    %949 = vmatprep.subr.bf16.mxu0 %v728
    %950 = vmatpush1.bf16.msra.mxu0 %v727
    %951 = vmatprep.subr.bf16.mxu0 %v730
    %952 = vmatpush1.bf16.msra.mxu0 %v729
    %953 = vmatprep.subr.bf16.mxu0 %v732
    %954 = vmatpush1.bf16.msra.mxu0 %v731
    %955 = vmatprep.subr.bf16.mxu0 %v734
    %956 = vmatpush1.bf16.msra.mxu0 %v733
    %957 = vmatprep.subr.bf16.mxu0 %v736
    %958 = vmatpush1.bf16.msra.mxu0 %v735
    %959 = vmatprep.subr.bf16.mxu0 %v738
    %960 = vmatpush1.bf16.msra.mxu0 %v737
    %961 = vmatprep.subr.bf16.mxu0 %v740
    %962 = vmatpush1.bf16.msra.mxu0 %v739
    %963 = vmatprep.subr.bf16.mxu0 %v742
    %964 = vmatpush1.bf16.msra.mxu0 %v741
    %965 = vmatprep.subr.bf16.mxu0 %v744
    %966 = vmatpush1.bf16.msra.mxu0 %v743
    %967 = vmatprep.subr.bf16.mxu0 %v746
    %968 = vmatpush1.bf16.msra.mxu0 %v745
    %969 = vmatprep.subr.bf16.mxu0 %v748
    %970 = vmatpush1.bf16.msra.mxu0 %v747
    %971 = vmatprep.subr.bf16.mxu0 %v750
    %972 = vmatpush1.bf16.msra.mxu0 %v749
    %973 = vmatprep.subr.bf16.mxu0 %v752
    %974 = vmatpush1.bf16.msra.mxu0 %v751
    %975 = vmatprep.subr.bf16.mxu0 %v754
    %976 = vmatpush1.bf16.msra.mxu0 %v753
    %977 = vmatprep.subr.bf16.mxu0 %v756
    %978 = vmatpush1.bf16.msra.mxu0 %v755
    %979 = vmatprep.mubr.bf16.mxu0 %v255
    %980 = vmatmul.mubr.bf16.gmra.mrb[0].mxu0 %v254
    %v981 = vpop.f32.mrb[0].mxu0
    %v982 = vadd.f32 %v939, %v981
    %v983 = vpop.f32.mrb[0].mxu0
    %v984 = vadd.f32 %v941, %v983
    %v985 = vpop.f32.mrb[0].mxu0
    %v986 = vadd.f32 %v943, %v985
    %v987 = vpop.f32.mrb[0].mxu0
    %v988 = vadd.f32 %v945, %v987
    %989 = vdwg.mxu0
    %990 = vmatprep.subr.bf16.mxu0 %v758
    %991 = vmatpush1.bf16.msra.mxu0 %v757
    %992 = vmatprep.subr.bf16.mxu0 0
    %993 = vmatpush1.bf16.msra.mxu0 0
    %994 = vmatprep.subr.bf16.mxu0 0
    %995 = vmatpush1.bf16.msra.mxu0 0
    %996 = vmatprep.subr.bf16.mxu0 0
    %997 = vmatpush1.bf16.msra.mxu0 0
    %998 = vmatprep.subr.bf16.mxu0 0
    %999 = vmatpush1.bf16.msra.mxu0 0
    %1000 = vmatprep.subr.bf16.mxu0 0
    %1001 = vmatpush1.bf16.msra.mxu0 0
    %1002 = vmatprep.subr.bf16.mxu0 0
    %1003 = vmatpush1.bf16.msra.mxu0 0
    %1004 = vmatprep.subr.bf16.mxu0 0
    %1005 = vmatpush1.bf16.msra.mxu0 0
    %1006 = vmatprep.subr.bf16.mxu0 0
    %1007 = vmatpush1.bf16.msra.mxu0 0
    %1008 = vmatprep.subr.bf16.mxu0 0
    %1009 = vmatpush1.bf16.msra.mxu0 0
    %1010 = vmatprep.subr.bf16.mxu0 0
    %1011 = vmatpush1.bf16.msra.mxu0 0
    %1012 = vmatprep.subr.bf16.mxu0 0
    %1013 = vmatpush1.bf16.msra.mxu0 0
    %1014 = vmatprep.subr.bf16.mxu0 0
    %1015 = vmatpush1.bf16.msra.mxu0 0
    %1016 = vmatprep.subr.bf16.mxu0 0
    %1017 = vmatpush1.bf16.msra.mxu0 0
    %1018 = vmatprep.subr.bf16.mxu0 0
    %1019 = vmatpush1.bf16.msra.mxu0 0
    %1020 = vmatprep.subr.bf16.mxu0 0
    %1021 = vmatpush1.bf16.msra.mxu0 0
    %1022 = vmatprep.mubr.bf16.mxu0 0
    %1023 = vmatmul.mubr.bf16.gmra.mrb[0].mxu0 %v859
    %v1024 = vpop.f32.mrb[0].mxu0
    %v1025 = vadd.f32 %v982, %v1024
    %v1026 = vpop.f32.mrb[0].mxu0
    %v1027 = vadd.f32 %v984, %v1026
    %v1028 = vpop.f32.mrb[0].mxu0
    %v1029 = vadd.f32 %v986, %v1028
    %v1030 = vpop.f32.mrb[0].mxu0
    %v1031 = vadd.f32 %v988, %v1030
    %1032 = vdwg.mxu0
    %v1033 = vmax.f32 %v1025, 0.0
    %v1034 = vmax.f32 %v1027, 0.0
    %v1035 = vmax.f32 %v1029, 0.0
    %v1036 = vmax.f32 %v1031, 0.0
    %v1037 = vpack.c.bf16 %v1035, %v1033
    %v1038 = vpack.c.bf16 %v1036, %v1034
    %v1039 = vld [vmem:[#allocation5] sm:$0xf]
    %v1040 = vld [vmem:[#allocation5 + $0x4] sm:$0xf]
    %v1041 = vld [vmem:[#allocation5 + $0x8] sm:$0xf]
    %v1042 = vld [vmem:[#allocation5 + $0xc] sm:$0xf]
    %v1043 = vld [vmem:[#allocation5 + $0x10] sm:$0xf]
    %v1044 = vld [vmem:[#allocation5 + $0x14] sm:$0xf]
    %v1045 = vld [vmem:[#allocation5 + $0x18] sm:$0xf]
    %v1046 = vld [vmem:[#allocation5 + $0x1c] sm:$0xf]
    %v1047 = vld [vmem:[#allocation5 + $0x20] sm:$0xf]
    %v1048 = vld [vmem:[#allocation5 + $0x24] sm:$0xf]
    %v1049 = vld [vmem:[#allocation5 + $0x28] sm:$0xf]
    %v1050 = vld [vmem:[#allocation5 + $0x2c] sm:$0xf]
    %v1051 = vld [vmem:[#allocation5 + $0x30] sm:$0xf]
    %v1052 = vld [vmem:[#allocation5 + $0x34] sm:$0xf]
    %v1053 = vld [vmem:[#allocation5 + $0x38] sm:$0xf]
    %v1054 = vld [vmem:[#allocation5 + $0x3c] sm:$0xf]
    %v1055 = vld [vmem:[#allocation5 + $0x40] sm:$0xf]
    %v1056 = vld [vmem:[#allocation5 + $0x44] sm:$0xf]
    %v1057 = vld [vmem:[#allocation5 + $0x48] sm:$0xf]
    %v1058 = vld [vmem:[#allocation5 + $0x4c] sm:$0xf]
    %v1059 = vld [vmem:[#allocation5 + $0x50] sm:$0xf]
    %v1060 = vld [vmem:[#allocation5 + $0x54] sm:$0xf]
    %v1061 = vld [vmem:[#allocation5 + $0x58] sm:$0xf]
    %v1062 = vld [vmem:[#allocation5 + $0x5c] sm:$0xf]
    %v1063 = vld [vmem:[#allocation5 + $0x60] sm:$0xf]
    %v1064 = vld [vmem:[#allocation5 + $0x64] sm:$0xf]
    %v1065 = vld [vmem:[#allocation5 + $0x68] sm:$0xf]
    %v1066 = vld [vmem:[#allocation5 + $0x6c] sm:$0xf]
    %v1067 = vld [vmem:[#allocation5 + $0x70] sm:$0xf]
    %v1068 = vld [vmem:[#allocation5 + $0x74] sm:$0xf]
    %v1069 = vld [vmem:[#allocation5 + $0x78] sm:$0xf]
    %v1070 = vld [vmem:[#allocation5 + $0x7c] sm:$0xf]
    %v1071 = vld [vmem:[%s4] sm:$0x1]
    %v1073 = vlaneseq
    %v1074 = vshrl.u32 %v1073, 7
    %v1075 = vsub.s32 0, %v1074
    %v1076 = vrot.slane %v1071, %v1075
    %v1110 = vunpack.c.l.b16 %v1039
    %v1111 = vunpack.c.l.b16 %v1040
    %v1112 = vunpack.c.l.b16 %v1041
    %v1113 = vunpack.c.l.b16 %v1042
    %v1114 = vunpack.c.l.b16 %v1043
    %v1115 = vunpack.c.l.b16 %v1044
    %v1116 = vunpack.c.l.b16 %v1045
    %v1117 = vunpack.c.l.b16 %v1046
    %v1118 = vunpack.c.l.b16 %v1047
    %v1119 = vunpack.c.l.b16 %v1048
    %v1120 = vunpack.c.l.b16 %v1049
    %v1121 = vunpack.c.l.b16 %v1050
    %v1122 = vunpack.c.l.b16 %v1051
    %v1123 = vunpack.c.l.b16 %v1052
    %v1124 = vunpack.c.l.b16 %v1053
    %v1125 = vunpack.c.l.b16 %v1054
    %v1126 = vunpack.c.l.b16 %v1055
    %v1127 = vunpack.c.l.b16 %v1056
    %v1128 = vunpack.c.l.b16 %v1057
    %v1129 = vunpack.c.l.b16 %v1058
    %v1130 = vunpack.c.l.b16 %v1059
    %v1131 = vunpack.c.l.b16 %v1060
    %v1132 = vunpack.c.l.b16 %v1061
    %v1133 = vunpack.c.l.b16 %v1062
    %v1134 = vunpack.c.l.b16 %v1063
    %v1135 = vunpack.c.l.b16 %v1064
    %v1136 = vunpack.c.l.b16 %v1065
    %v1137 = vunpack.c.l.b16 %v1066
    %v1138 = vunpack.c.l.b16 %v1067
    %v1139 = vunpack.c.l.b16 %v1068
    %v1140 = vunpack.c.l.b16 %v1069
    %v1141 = vunpack.c.l.b16 %v1070
    %v1142 = vpack.c.b16 %v1111, %v1110
    %v1143 = vpack.c.b16 %v1113, %v1112
    %v1144 = vpack.c.b16 %v1115, %v1114
    %v1145 = vpack.c.b16 %v1117, %v1116
    %v1146 = vpack.c.b16 %v1119, %v1118
    %v1147 = vpack.c.b16 %v1121, %v1120
    %v1148 = vpack.c.b16 %v1123, %v1122
    %v1149 = vpack.c.b16 %v1125, %v1124
    %v1150 = vpack.c.b16 %v1127, %v1126
    %v1151 = vpack.c.b16 %v1129, %v1128
    %v1152 = vpack.c.b16 %v1131, %v1130
    %v1153 = vpack.c.b16 %v1133, %v1132
    %v1154 = vpack.c.b16 %v1135, %v1134
    %v1155 = vpack.c.b16 %v1137, %v1136
    %v1156 = vpack.c.b16 %v1139, %v1138
    %v1157 = vpack.c.b16 %v1141, %v1140
    %1174 = vmatprep.subr.bf16.mxu0 0
    %1175 = vmatpush1.bf16.msra.mxu0 %v1142
    %1176 = vmatprep.subr.bf16.mxu0 0
    %1177 = vmatpush1.bf16.msra.mxu0 %v1143
    %1178 = vmatprep.subr.bf16.mxu0 0
    %1179 = vmatpush1.bf16.msra.mxu0 %v1144
    %1180 = vmatprep.subr.bf16.mxu0 0
    %1181 = vmatpush1.bf16.msra.mxu0 %v1145
    %1182 = vmatprep.subr.bf16.mxu0 0
    %1183 = vmatpush1.bf16.msra.mxu0 %v1146
    %1184 = vmatprep.subr.bf16.mxu0 0
    %1185 = vmatpush1.bf16.msra.mxu0 %v1147
    %1186 = vmatprep.subr.bf16.mxu0 0
    %1187 = vmatpush1.bf16.msra.mxu0 %v1148
    %1188 = vmatprep.subr.bf16.mxu0 0
    %1189 = vmatpush1.bf16.msra.mxu0 %v1149
    %1190 = vmatprep.subr.bf16.mxu0 0
    %1191 = vmatpush1.bf16.msra.mxu0 %v1150
    %1192 = vmatprep.subr.bf16.mxu0 0
    %1193 = vmatpush1.bf16.msra.mxu0 %v1151
    %1194 = vmatprep.subr.bf16.mxu0 0
    %1195 = vmatpush1.bf16.msra.mxu0 %v1152
    %1196 = vmatprep.subr.bf16.mxu0 0
    %1197 = vmatpush1.bf16.msra.mxu0 %v1153
    %1198 = vmatprep.subr.bf16.mxu0 0
    %1199 = vmatpush1.bf16.msra.mxu0 %v1154
    %1200 = vmatprep.subr.bf16.mxu0 0
    %1201 = vmatpush1.bf16.msra.mxu0 %v1155
    %1202 = vmatprep.subr.bf16.mxu0 0
    %1203 = vmatpush1.bf16.msra.mxu0 %v1156
    %1204 = vmatprep.subr.bf16.mxu0 0
    %1205 = vmatpush1.bf16.msra.mxu0 %v1157
    %1206 = vmatprep.mubr.bf16.mxu0 %v1038
    %1207 = vmatmul.mubr.bf16.gmra.mrb[0].mxu0 %v1037
    %v1208 = vpop.f32.mrb[0].mxu0
    %v1209 = vadd.f32 %v1076, %v1208
    %v1210 = vpop.f32.mrb[0].mxu0
    %v1211 = vpop.f32.mrb[0].mxu0
    %v1212 = vadd.f32 %v1076, %v1211
    %v1213 = vpop.f32.mrb[0].mxu0
    %1214 = vdwg.mxu0
    %v1215 = vmax.f32 %v1209, 0.0
    %v1216 = vmax.f32 %v1212, 0.0
    %v1217 = vpack.c.bf16 %v1216, %v1215
    %v1218 = vld [vmem:[%s5] sm:$0xf]
    %v1219 = vld [vmem:[%s5 + $0x4] sm:$0xf]
    %v1220 = vld [vmem:[%s5 + $0x8] sm:$0xf]
    %v1221 = vld [vmem:[%s5 + $0xc] sm:$0xf]
    %v1222 = vld [vmem:[%s5 + $0x10] sm:$0xf]
    %v1223 = vld [vmem:[%s5 + $0x14] sm:$0xf]
    %v1224 = vld [vmem:[%s5 + $0x18] sm:$0xf]
    %v1225 = vld [vmem:[%s5 + $0x1c] sm:$0xf]
    %v1226 = vld [vmem:[%s5 + $0x20] sm:$0xf]
    %v1227 = vld [vmem:[%s5 + $0x24] sm:$0xf]
    %v1228 = vld [vmem:[%s5 + $0x28] sm:$0xf]
    %v1229 = vld [vmem:[%s5 + $0x2c] sm:$0xf]
    %v1230 = vld [vmem:[%s5 + $0x30] sm:$0xf]
    %v1231 = vld [vmem:[%s5 + $0x34] sm:$0xf]
    %v1232 = vld [vmem:[%s5 + $0x38] sm:$0xf]
    %v1233 = vld [vmem:[%s5 + $0x3c] sm:$0xf]
    %v1234 = vld [vmem:[%s6] sm:$0x1]
    %v1236 = vlaneseq
    %v1237 = vshrl.u32 %v1236, 7
    %v1238 = vsub.s32 0, %v1237
    %v1239 = vrot.slane %v1234, %v1238
    %v1257 = vunpack.c.l.b16 %v1218
    %v1258 = vunpack.c.l.b16 %v1219
    %v1259 = vunpack.c.l.b16 %v1220
    %v1260 = vunpack.c.l.b16 %v1221
    %v1261 = vunpack.c.l.b16 %v1222
    %v1262 = vunpack.c.l.b16 %v1223
    %v1263 = vunpack.c.l.b16 %v1224
    %v1264 = vunpack.c.l.b16 %v1225
    %v1265 = vunpack.c.l.b16 %v1226
    %v1266 = vunpack.c.l.b16 %v1227
    %v1267 = vunpack.c.l.b16 %v1228
    %v1268 = vunpack.c.l.b16 %v1229
    %v1269 = vunpack.c.l.b16 %v1230
    %v1270 = vunpack.c.l.b16 %v1231
    %v1271 = vunpack.c.l.b16 %v1232
    %v1272 = vunpack.c.l.b16 %v1233
    %v1273 = vpack.c.b16 %v1258, %v1257
    %v1274 = vpack.c.b16 %v1260, %v1259
    %v1275 = vpack.c.b16 %v1262, %v1261
    %v1276 = vpack.c.b16 %v1264, %v1263
    %v1277 = vpack.c.b16 %v1266, %v1265
    %v1278 = vpack.c.b16 %v1268, %v1267
    %v1279 = vpack.c.b16 %v1270, %v1269
    %v1280 = vpack.c.b16 %v1272, %v1271
    %1289 = vmatprep.subr.bf16.mxu0 0
    %1290 = vmatpush1.bf16.msra.mxu0 %v1273
    %1291 = vmatprep.subr.bf16.mxu0 0
    %1292 = vmatpush1.bf16.msra.mxu0 %v1274
    %1293 = vmatprep.subr.bf16.mxu0 0
    %1294 = vmatpush1.bf16.msra.mxu0 %v1275
    %1295 = vmatprep.subr.bf16.mxu0 0
    %1296 = vmatpush1.bf16.msra.mxu0 %v1276
    %1297 = vmatprep.subr.bf16.mxu0 0
    %1298 = vmatpush1.bf16.msra.mxu0 %v1277
    %1299 = vmatprep.subr.bf16.mxu0 0
    %1300 = vmatpush1.bf16.msra.mxu0 %v1278
    %1301 = vmatprep.subr.bf16.mxu0 0
    %1302 = vmatpush1.bf16.msra.mxu0 %v1279
    %1303 = vmatprep.subr.bf16.mxu0 0
    %1304 = vmatpush1.bf16.msra.mxu0 %v1280
    %1305 = vmatprep.subr.bf16.mxu0 0
    %1306 = vmatpush1.bf16.msra.mxu0 0
    %1307 = vmatprep.subr.bf16.mxu0 0
    %1308 = vmatpush1.bf16.msra.mxu0 0
    %1309 = vmatprep.subr.bf16.mxu0 0
    %1310 = vmatpush1.bf16.msra.mxu0 0
    %1311 = vmatprep.subr.bf16.mxu0 0
    %1312 = vmatpush1.bf16.msra.mxu0 0
    %1313 = vmatprep.subr.bf16.mxu0 0
    %1314 = vmatpush1.bf16.msra.mxu0 0
    %1315 = vmatprep.subr.bf16.mxu0 0
    %1316 = vmatpush1.bf16.msra.mxu0 0
    %1317 = vmatprep.subr.bf16.mxu0 0
    %1318 = vmatpush1.bf16.msra.mxu0 0
    %1319 = vmatprep.subr.bf16.mxu0 0
    %1320 = vmatpush1.bf16.msra.mxu0 0
    %1321 = vmatprep.mubr.bf16.mxu0 0
    %1322 = vmatmul.mubr.bf16.gmra.mrb[0].mxu0 %v1217
    %v1323 = vpop.f32.mrb[0].mxu0
    %v1324 = vadd.f32 %v1239, %v1323
    %v1325 = vpop.f32.mrb[0].mxu0
    %v1326 = vpop.f32.mrb[0].mxu0
    %v1327 = vadd.f32 %v1239, %v1326
    %v1328 = vpop.f32.mrb[0].mxu0
    %1329 = vdwg.mxu0
    %v1330 = vmax.f32 %v1324, 0.0
    %v1331 = vmax.f32 %v1327, 0.0
    %v1332 = vpack.c.bf16 %v1331, %v1330
    %v1333 = vld [vmem:[%s7] sm:$0xf]
    %v1334 = vld [vmem:[%s7 + $0x4] sm:$0xf]
    %v1335 = vld [vmem:[%s7 + $0x8] sm:$0xf]
    %v1336 = vld [vmem:[%s7 + $0xc] sm:$0xf]
    %v1337 = vld [vmem:[%s7 + $0x10] sm:$0xf]
    %v1338 = vld [vmem:[%s7 + $0x14] sm:$0xf]
    %v1339 = vld [vmem:[%s7 + $0x18] sm:$0xf]
    %v1340 = vld [vmem:[%s7 + $0x1c] sm:$0xf]
    %v1341 = vld [vmem:[%s8] sm:$0x1]
    %v1343 = vlaneseq
    %v1344 = vshrl.u32 %v1343, 7
    %v1345 = vsub.s32 0, %v1344
    %v1346 = vrot.slane %v1341, %v1345
    %v1356 = vunpack.c.l.b16 %v1333
    %v1357 = vunpack.c.l.b16 %v1334
    %v1358 = vunpack.c.l.b16 %v1335
    %v1359 = vunpack.c.l.b16 %v1336
    %v1360 = vunpack.c.l.b16 %v1337
    %v1361 = vunpack.c.l.b16 %v1338
    %v1362 = vunpack.c.l.b16 %v1339
    %v1363 = vunpack.c.l.b16 %v1340
    %v1364 = vpack.c.b16 %v1357, %v1356
    %v1365 = vpack.c.b16 %v1359, %v1358
    %v1366 = vpack.c.b16 %v1361, %v1360
    %v1367 = vpack.c.b16 %v1363, %v1362
    %vm1372 = vcmask 523264
    %v1374 = vsel %vm1372, %v1332, 0
    %1376 = vmatprep.subr.bf16.mxu0 0
    %1377 = vmatpush1.bf16.msra.mxu0 %v1364
    %1378 = vmatprep.subr.bf16.mxu0 0
    %1379 = vmatpush1.bf16.msra.mxu0 %v1365
    %1380 = vmatprep.subr.bf16.mxu0 0
    %1381 = vmatpush1.bf16.msra.mxu0 %v1366
    %1382 = vmatprep.subr.bf16.mxu0 0
    %1383 = vmatpush1.bf16.msra.mxu0 %v1367
    %1384 = vmatprep.subr.bf16.mxu0 0
    %1385 = vmatpush1.bf16.msra.mxu0 0
    %1386 = vmatprep.subr.bf16.mxu0 0
    %1387 = vmatpush1.bf16.msra.mxu0 0
    %1388 = vmatprep.subr.bf16.mxu0 0
    %1389 = vmatpush1.bf16.msra.mxu0 0
    %1390 = vmatprep.subr.bf16.mxu0 0
    %1391 = vmatpush1.bf16.msra.mxu0 0
    %1392 = vmatprep.subr.bf16.mxu0 0
    %1393 = vmatpush1.bf16.msra.mxu0 0
    %1394 = vmatprep.subr.bf16.mxu0 0
    %1395 = vmatpush1.bf16.msra.mxu0 0
    %1396 = vmatprep.subr.bf16.mxu0 0
    %1397 = vmatpush1.bf16.msra.mxu0 0
    %1398 = vmatprep.subr.bf16.mxu0 0
    %1399 = vmatpush1.bf16.msra.mxu0 0
    %1400 = vmatprep.subr.bf16.mxu0 0
    %1401 = vmatpush1.bf16.msra.mxu0 0
    %1402 = vmatprep.subr.bf16.mxu0 0
    %1403 = vmatpush1.bf16.msra.mxu0 0
    %1404 = vmatprep.subr.bf16.mxu0 0
    %1405 = vmatpush1.bf16.msra.mxu0 0
    %1406 = vmatprep.subr.bf16.mxu0 0
    %1407 = vmatpush1.bf16.msra.mxu0 0
    %1408 = vmatprep.mubr.bf16.mxu0 0
    %1409 = vmatmul.mubr.bf16.gmra.mrb[0].mxu0 %v1374
    %v1410 = vpop.f32.mrb[0].mxu0
    %v1411 = vadd.f32 %v1346, %v1410
    %v1412 = vpop.f32.mrb[0].mxu0
    %v1413 = vpop.f32.mrb[0].mxu0
    %v1414 = vadd.f32 %v1346, %v1413
    %v1415 = vpop.f32.mrb[0].mxu0
    %1416 = vdwg.mxu0
    %1417 = vmax.xlane.f32.xlu0 %v1411
    %v1418 = vpop.xlane.xlu0 %1417
    %1419 = vmax.xlane.f32.xlu0 %v1414
    %v1420 = vpop.xlane.xlu0 %1419
    %v1421 = vsub.f32 %v1411, %v1418
    %v1422 = vsub.f32 %v1414, %v1420
    %v1423 = vmul.f32 %v1421, 1.442695
    %v1424 = vpow.pop %v1423
    %v1425 = vmul.f32 %v1422, 1.442695
    %v1426 = vpow.pop %v1425
    %1427 = vadd.xlane.f32.xlu0 %v1424
    %v1428 = vpop.xlane.xlu0 %1427
    %1429 = vadd.xlane.f32.xlu0 %v1426
    %v1430 = vpop.xlane.xlu0 %1429
    %v1431 = vlog2.pop %v1428
    %v1432 = vmul.f32 %v1431, 0.6931472
    %v1433 = vlog2.pop %v1430
    %v1434 = vmul.f32 %v1433, 0.6931472
    %v1435 = vsub.f32 %v1421, %v1432
    %v1436 = vsub.f32 %v1422, %v1434
    %v1437 = vpack.c.bf16 %v1436, %v1435
    %v1439 = vcombine.high %v1437, %v1437
    %v1441 = vunpack.c.l.s4 1966171168
    %v1442 = vunpack.c.0.s8 %v1441
    %v1443 = vlaneseq
    %v1444 = vshrl.u32 %v1443, 7
    %v1445 = vsub.s32 %v1442, %v1444
    %v1446 = vrot.slane %v1437, %v1445
    %v1448 = vunpack.c.l.s4 1966171168
    %v1449 = vunpack.c.0.s8 %v1448
    %v1450 = vlaneseq
    %v1451 = vshrl.u32 %v1450, 7
    %v1452 = vsub.s32 %v1449, %v1451
    %v1453 = vrot.slane %v1439, %v1452
    %v1454 = vcombine.high %v1446, %v1446
    %v1455 = vcombine.high %v1453, %v1453
    %v1457 = vunpack.c.l.s4 1966171168
    %v1458 = vunpack.c.0.s8 %v1457
    %v1459 = vlaneseq
    %v1460 = vshrl.u32 %v1459, 7
    %v1461 = vsub.s32 %v1458, %v1460
    %v1462 = vrot.slane %v1446, %v1461
    %v1464 = vunpack.c.l.s4 1966171168
    %v1465 = vunpack.c.0.s8 %v1464
    %v1466 = vlaneseq
    %v1467 = vshrl.u32 %v1466, 7
    %v1468 = vsub.s32 %v1465, %v1467
    %v1469 = vrot.slane %v1453, %v1468
    %v1471 = vunpack.c.l.s4 1966171168
    %v1472 = vunpack.c.0.s8 %v1471
    %v1473 = vlaneseq
    %v1474 = vshrl.u32 %v1473, 7
    %v1475 = vsub.s32 %v1472, %v1474
    %v1476 = vrot.slane %v1454, %v1475
    %v1478 = vunpack.c.l.s4 1966171168
    %v1479 = vunpack.c.0.s8 %v1478
    %v1480 = vlaneseq
    %v1481 = vshrl.u32 %v1480, 7
    %v1482 = vsub.s32 %v1479, %v1481
    %v1483 = vrot.slane %v1455, %v1482
    %v1484 = vcombine.high %v1462, %v1462
    %v1485 = vcombine.high %v1469, %v1469
    %v1486 = vcombine.high %v1476, %v1476
    %v1487 = vcombine.high %v1483, %v1483
    %1496 = vst [vmem:[#allocation7] sm:$0x1] %v1462
    %1497 = vst [vmem:[#allocation7 + $0x1] sm:$0x1] %v1476
    %1498 = vst [vmem:[#allocation7 + $0x2] sm:$0x1] %v1484
    %1499 = vst [vmem:[#allocation7 + $0x3] sm:$0x1] %v1486
    %1500 = vst [vmem:[#allocation7 + $0x4] sm:$0x1] %v1469
    %1501 = vst [vmem:[#allocation7 + $0x5] sm:$0x1] %v1483
    %1502 = vst [vmem:[#allocation7 + $0x6] sm:$0x1] %v1485
    %1503 = vst [vmem:[#allocation7 + $0x7] sm:$0x1] %v1487
    // Predicated region
    $region46: #{tpu_custom_call.1} parent=1 // pred_check
      _
    $region47: #{tpu_custom_call.1} parent=1 // pred_check_branch
      %1505 = sbr.rel (0) target = $region49
    $region48: #{tpu_custom_call.1} parent=1 // pred_region
      %s1507 = ssub.s32 128, 16
      %1508 = vsyncadd [#allocation4], %s1507
      %s1509 = sshll.u32 [#allocation7], 4
      %s1510 = int_to_ptr.vmem [resolvable:$true] %s1509
      %1515 = dma.vmem_to_hbm [thread:$0]  %s1510, 16, %s9, [#allocation4], 16, 16, 1
    $region49: #{tpu_custom_call.1} parent=1 // pred_fallthru
      _
    // Predicated region
    $region50: #{tpu_custom_call.1} parent=1 // pred_check
      _
    $region51: #{tpu_custom_call.1} parent=1 // pred_check_branch
      %1517 = sbr.rel (0) target = $region53
    $region52: #{tpu_custom_call.1} parent=1 // pred_region
      %1518 = dma.done [#allocation4], 128
    $region53: #{tpu_custom_call.1} parent=1 // pred_fallthru
      _
    %1519 = vsyncpa [#allocation3], 1
    %1520 = vsyncpa [#allocation6], 1
    %1521 = vsyncpa [#allocation4], 1

</llo_original>
